<compile_context>
chip_gen: v6e
topology: v6e:2x2x1
jax: 0.10.0
libtpu: 0.0.40
codegen_flags: <defaults>
</compile_context>

<pallas_src>
import math
from functools import partial

import jax
import jax.numpy as jnp
from jax.experimental import pallas as pl
from jax.experimental.pallas import tpu as pltpu


# ---------------------------------------------------------------------------
# Kernel body.
# Grid = (n_e, n_o, n_i): E-blocks x O-blocks (both "parallel") x I-blocks
# (reduction, innermost "arbitrary"). f32 accumulator lives in VMEM scratch.
# ---------------------------------------------------------------------------
def _parallel_linear_kernel(*refs, x_shared: bool, has_bias: bool):
    if has_bias:
        x_ref, w_ref, b_ref, o_ref, acc_ref = refs
    else:
        x_ref, w_ref, o_ref, acc_ref = refs
        b_ref = None

    i = pl.program_id(2)

    @pl.when(i == 0)
    def _init():
        acc_ref[...] = jnp.zeros_like(acc_ref)

    w = w_ref[...]                       # (eb, to, ti) -- native (O, I) layout
    x = x_ref[...]                       # (eb, B, ti) or (1, B, ti) when shared
    if x_shared:
        # x is shared across the parallel dims: replicate the single resident
        # slab across the E-block in vregs (no HBM duplication, no extra DMA).
        x = jnp.broadcast_to(x, (w.shape[0], x.shape[1], x.shape[2]))

    # Contract the last dims of both operands ("eoi" RHS): weights stay in
    # their native layout; no HBM transpose copy is ever made.
    acc_ref[...] += jnp.einsum(
        "ebi,eoi->ebo", x, w, preferred_element_type=jnp.float32
    )

    @pl.when(i == pl.num_programs(2) - 1)
    def _finalize():
        acc = acc_ref[...]
        if has_bias:
            acc = acc + b_ref[...].astype(jnp.float32)   # (eb, 1, to) broadcast
        o_ref[...] = acc.astype(o_ref.dtype)


# ---------------------------------------------------------------------------
# Hardware-aware tile selection.
# ---------------------------------------------------------------------------
def _tpu_generation():
    """Best-effort TPU generation from the device kind string (e.g. 'TPU v6e')."""
    try:
        kind = jax.devices()[0].device_kind.lower()
    except Exception:
        return None
    for g in (7, 6, 5, 4, 3, 2):
        if f"v{g}" in kind or f"tpu{g}" in kind:
            return g
    return None


def _vmem_capacity_bytes():
    """Physical VMEM per TensorCore; generation-aware with conservative fallback."""
    try:
        cap = getattr(pltpu.get_tpu_info(), "vmem_capacity_bytes", None)
        if cap:
            return int(cap)
    except Exception:
        pass
    gen = _tpu_generation()
    if gen in (4, 5, 6):
        return 128 * 1024 * 1024
    if gen in (2, 3):
        return 16 * 1024 * 1024
    return 64 * 1024 * 1024            # v7x (and unknown: be conservative)


def _divisors_desc(n):
    ds = set()
    d = 1
    while d * d <= n:
        if n % d == 0:
            ds.add(d)
            ds.add(n // d)
        d += 1
    return sorted(ds, reverse=True)


def _lane_tile_candidates(n, unit=128):
    """Tiles for a layout dim: the full dim, or 128-aligned exact divisors."""
    return [d for d in _divisors_desc(n) if d == n or d % unit == 0]


def _footprint_bytes(eb, ti, to, B, itemsize, x_shared, has_bias):
    x_b = (1 if x_shared else eb) * B * ti * itemsize
    w_b = eb * to * ti * itemsize
    b_b = eb * 8 * to * itemsize if has_bias else 0      # size-1 sublane pads to 8
    o_b = eb * B * to * itemsize
    acc = eb * B * to * 4                                 # f32 accumulator scratch
    return 2 * (x_b + w_b + b_b + o_b) + acc              # x2: double-buffered pipeline


def _select_tiles(E, B, I, O, itemsize, x_shared, has_bias, budget, want_multi_step):
    ti_cands = _lane_tile_candidates(I)
    to_cands = _lane_tile_candidates(O)

    # (1) Pick (to, ti) so a single parallel slice (eb=1) fits the budget.
    #     Prefer the largest O tile (fewer x re-reads), then the largest I tile.
    ti, to, ok = ti_cands[-1], to_cands[-1], False
    for t_o in to_cands:
        for t_i in ti_cands:
            if _footprint_bytes(1, t_i, t_o, B, itemsize, x_shared, has_bias) <= budget:
                ti, to, ok = t_i, t_o, True
                break
        if ok:
            break
    # TODO(synk): if even the smallest lane-aligned tiles do not fit (huge B),
    # B would also need tiling; we fall back to the smallest candidates here.

    # (2) Grow the E block to the largest exact divisor of E that still fits.
    eb = 1
    for d in _divisors_desc(E):
        if _footprint_bytes(d, ti, to, B, itemsize, x_shared, has_bias) <= budget:
            eb = d
            break

    # (3) v7x has 2 TensorCores: keep >=4 parallel grid steps (>=2 pipelined
    #     steps per core) when the problem allows. v5e/v6e (1 TC) keep the
    #     largest block -- fewer, larger DMAs, less per-step overhead.
    if want_multi_step:
        n_o = O // to
        if (E // eb) * n_o < 4:
            cands = [d for d in _divisors_desc(E)
                     if d <= eb and (E // d) * n_o >= 4]
            if cands:
                eb = cands[0]
            elif E > 1:
                eb = 1
    return eb, to, ti


# ---------------------------------------------------------------------------
# Wrapper.
# ---------------------------------------------------------------------------
def parallel_linear_pallas(x, weight, bias=None):
    """Pallas implementation of ParallelLinear.forward.

    x:      (*lead, B, in_features)  with lead broadcasting against extra_dims
    weight: (*extra_dims, out_features, in_features)
    bias:   (*extra_dims, out_features) or None
    returns (*extra_dims, B, out_features)
    """
    extra_dims = weight.shape[:-2]
    O, I = weight.shape[-2:]
    assert x.shape[-1] == I, "last dim of x must equal in_features"
    B = x.shape[-2]
    E = int(math.prod(extra_dims)) if extra_dims else 1

    if x.ndim > weight.ndim:
        # TODO(synk): x with MORE leading dims than the weight's extra_dims
        # (valid PyTorch matmul broadcasting) is not supported by this kernel.
        raise NotImplementedError("x has more leading dims than weight")

    x_lead = x.shape[:-2]
    if len(x_lead) == 0 or all(int(d) == 1 for d in x_lead):
        # x is shared across every parallel slice: keep ONE (B, I) slab in HBM.
        x_shared = True
        xf = x.reshape(1, B, I)
    elif tuple(x_lead) == tuple(extra_dims):
        x_shared = False
        xf = x.reshape(E, B, I)
    else:
        # Partial broadcast of leading dims: materialize (rare; kept for parity).
        x_shared = False
        xf = jnp.broadcast_to(x, (*extra_dims, B, I)).reshape(E, B, I)

    wf = weight.reshape(E, O, I)          # contiguous reshape only -- no HBM copy
    has_bias = bias is not None
    bf = bias.reshape(E, 1, O) if has_bias else None

    out_dtype = jnp.result_type(x.dtype, weight.dtype)
    itemsize = max(jnp.dtype(x.dtype).itemsize, jnp.dtype(weight.dtype).itemsize)

    cap = _vmem_capacity_bytes()
    block_budget = int(0.70 * cap)        # sizing budget (headroom for estimate error)
    vmem_limit = int(0.85 * cap)          # scoped-VMEM limit handed to Mosaic
    gen = _tpu_generation()
    want_multi_step = gen is not None and gen >= 7     # 2 TensorCores / chip

    eb, to, ti = _select_tiles(E, B, I, O, itemsize, x_shared, has_bias,
                               block_budget, want_multi_step)
    n_e, n_o, n_i = E // eb, O // to, I // ti

    in_specs = [
        pl.BlockSpec(
            (1 if x_shared else eb, B, ti),
            (lambda e, o, i: (0, 0, i)) if x_shared else (lambda e, o, i: (e, 0, i)),
        ),
        pl.BlockSpec((eb, to, ti), lambda e, o, i: (e, o, i)),
    ]
    operands = [xf, wf]
    if has_bias:
        in_specs.append(pl.BlockSpec((eb, 1, to), lambda e, o, i: (e, 0, o)))
        operands.append(bf)

    flops = 2 * E * B * O * I
    bytes_accessed = itemsize * (
        (B * I if x_shared else E * B * I) + E * O * I + E * B * O
        + (E * O if has_bias else 0)
    )
    cost = pl.CostEstimate(flops=flops, transcendentals=0,
                           bytes_accessed=bytes_accessed)

    kernel = partial(_parallel_linear_kernel, x_shared=x_shared, has_bias=has_bias)

    out = pl.pallas_call(
        kernel,
        out_shape=jax.ShapeDtypeStruct((E, B, O), out_dtype),
        grid_spec=pltpu.PrefetchScalarGridSpec(
            num_scalar_prefetch=0,
            grid=(n_e, n_o, n_i),
            in_specs=in_specs,
            out_specs=pl.BlockSpec((eb, B, to), lambda e, o, i: (e, 0, o)),
            scratch_shapes=[pltpu.VMEM((eb, B, to), jnp.float32)],
        ),
        compiler_params=pltpu.CompilerParams(
            dimension_semantics=("parallel", "parallel", "arbitrary"),
            vmem_limit_bytes=vmem_limit,
        ),
        cost_estimate=cost,
    )(*operands)

    return out.reshape(*extra_dims, B, O)


# ---------------------------------------------------------------------------
# Pure-JAX reference + deterministic init (mirrors the PyTorch module).
# ---------------------------------------------------------------------------
def parallel_linear_ref(x, weight, bias=None):
    ret = jnp.matmul(x, jnp.swapaxes(weight, -1, -2))
    if bias is not None:
        ret = ret + bias[..., None, :]
    return ret


def init_params(key, extra_dims, in_features, out_features, dtype=jnp.float32):
    bound = 1.0 / math.sqrt(in_features) if in_features > 0 else 0.0
    k1, k2 = jax.random.split(key, 2)
    u = partial(jax.random.uniform, minval=-bound, maxval=bound, dtype=dtype)
    weight = u(k1, (*extra_dims, out_features, in_features))
    bias = u(k2, (*extra_dims, out_features))
    return weight, bias


if __name__ == "__main__":
    extra_dims = (2, 3)
    batch = 4
    in_features = 16
    out_features = 32
    dtype = jnp.float32

    key = jax.random.PRNGKey(0)
    kp, kx, ks = jax.random.split(key, 3)

    weight, bias = init_params(kp, extra_dims, in_features, out_features, dtype)
    x = jax.random.normal(kx, (*extra_dims, batch, in_features), dtype=dtype)
    x_sh = jax.random.normal(ks, (batch, in_features), dtype=dtype)

    # 1) Per-slice x, with bias.
    out = jax.block_until_ready(parallel_linear_pallas(x, weight, bias))
    ref = parallel_linear_ref(x, weight, bias)
    assert out.shape == ref.shape == (*extra_dims, batch, out_features)
    assert jnp.allclose(out, ref, atol=1e-5, rtol=1e-5), (
        f"max abs err (bias) {float(jnp.max(jnp.abs(out - ref)))}"
    )

    # 2) Per-slice x, no bias (trace-time elision of the bias stream).
    out_nb = jax.block_until_ready(parallel_linear_pallas(x, weight, None))
    ref_nb = parallel_linear_ref(x, weight, None)
    assert jnp.allclose(out_nb, ref_nb, atol=1e-5, rtol=1e-5), (
        f"max abs err (no bias) {float(jnp.max(jnp.abs(out_nb - ref_nb)))}"
    )

    # 3) x shared across the parallel dims (PyTorch matmul broadcasting): only
    #    ONE (B, I) slab lives in HBM; broadcast is done by the index_map.
    out_sh = jax.block_until_ready(parallel_linear_pallas(x_sh, weight, bias))
    ref_sh = parallel_linear_ref(x_sh, weight, bias)
    assert out_sh.shape == (*extra_dims, batch, out_features)
    assert jnp.allclose(out_sh, ref_sh, atol=1e-5, rtol=1e-5), (
        f"max abs err (shared x) {float(jnp.max(jnp.abs(out_sh - ref_sh)))}"
    )

    print("KERNEL_OK")
</pallas_src>

<mosaic_0001>
module attributes {stable_mosaic.version = 11 : i64} {
  func.func @_parallel_linear_kernel(%arg0: i32, %arg1: i32, %arg2: i32, %arg3: memref<6x4x16xf32, #tpu.memory_space<vmem>>, %arg4: memref<6x32x16xf32, #tpu.memory_space<vmem>>, %arg5: memref<6x1x32xf32, #tpu.memory_space<vmem>>, %arg6: memref<6x4x32xf32, #tpu.memory_space<vmem>>, %arg7: memref<6x4x32xf32, #tpu.memory_space<vmem>>) attributes {dimension_semantics = [#tpu.dimension_semantics<parallel>, #tpu.dimension_semantics<parallel>, #tpu.dimension_semantics<arbitrary>], iteration_bounds = array<i64: 1, 1, 1>, scalar_prefetch = 0 : i64, scratch_operands = 1 : i64, tpu.core_type = #tpu.core_type<tc>, window_params = [{transform_indices = @transform_0, window_bounds = array<i64: 6, 4, 16>}, {transform_indices = @transform_1, window_bounds = array<i64: 6, 32, 16>}, {transform_indices = @transform_2, window_bounds = array<i64: 6, 1, 32>}, {transform_indices = @transform_3, window_bounds = array<i64: 6, 4, 32>}]} {
    %c0_i32 = arith.constant 0 : i32
    %0 = arith.cmpi eq, %arg2, %c0_i32 : i32
    %1 = arith.extui %0 : i1 to i32
    %c0_i32_0 = arith.constant 0 : i32
    %2 = arith.cmpi ne, %1, %c0_i32_0 : i32
    scf.if %2 {
      %cst_14 = arith.constant 0.000000e+00 : f32
      %12 = vector.broadcast %cst_14 : f32 to vector<6x4x32xf32>
      %c0_15 = arith.constant 0 : index
      %c0_16 = arith.constant 0 : index
      %c0_17 = arith.constant 0 : index
      %13 = vector.load %arg7[%c0_15, %c0_16, %c0_17] : memref<6x4x32xf32, #tpu.memory_space<vmem>>, vector<6x4x32xf32>
      tpu.vector_store %arg7[%c0_15, %c0_16, %c0_17], %12 {strides = array<i32>} : memref<6x4x32xf32, #tpu.memory_space<vmem>>, vector<6x4x32xf32>,
    } else {
    }
    %c0 = arith.constant 0 : index
    %c0_1 = arith.constant 0 : index
    %c0_2 = arith.constant 0 : index
    %3 = vector.load %arg4[%c0, %c0_1, %c0_2] : memref<6x32x16xf32, #tpu.memory_space<vmem>>, vector<6x32x16xf32>
    %c0_3 = arith.constant 0 : index
    %c0_4 = arith.constant 0 : index
    %c0_5 = arith.constant 0 : index
    %4 = vector.load %arg3[%c0_3, %c0_4, %c0_5] : memref<6x4x16xf32, #tpu.memory_space<vmem>>, vector<6x4x16xf32>
    %c0_6 = arith.constant 0 : index
    %c0_7 = arith.constant 0 : index
    %c0_8 = arith.constant 0 : index
    %5 = vector.load %arg7[%c0_6, %c0_7, %c0_8] : memref<6x4x32xf32, #tpu.memory_space<vmem>>, vector<6x4x32xf32>
    "tpu.trace_start"() <{level = 10 : i32, message = "ebi,eoi->ebo"}> : () -> ()
    %cst = arith.constant dense<0.000000e+00> : vector<6x4x32xf32>
    %6 = tpu.matmul %4, %3, %cst {dimension_numbers = #tpu.dot_dimension_numbers<[2], [2], [1], [1], [0, 0, 0, 1, 1, 1], [0], [0]>} : vector<6x4x16xf32>, vector<6x32x16xf32>, vector<6x4x32xf32> -> vector<6x4x32xf32>
    "tpu.trace_stop"() : () -> ()
    %7 = arith.addf %5, %6 : vector<6x4x32xf32>
    %c0_9 = arith.constant 0 : index
    %c0_10 = arith.constant 0 : index
    %c0_11 = arith.constant 0 : index
    %8 = vector.load %arg7[%c0_9, %c0_10, %c0_11] : memref<6x4x32xf32, #tpu.memory_space<vmem>>, vector<6x4x32xf32>
    tpu.vector_store %arg7[%c0_9, %c0_10, %c0_11], %7 {strides = array<i32>} : memref<6x4x32xf32, #tpu.memory_space<vmem>>, vector<6x4x32xf32>,
    %c0_i32_12 = arith.constant 0 : i32
    %9 = arith.cmpi eq, %arg2, %c0_i32_12 : i32
    %10 = arith.extui %9 : i1 to i32
    %c0_i32_13 = arith.constant 0 : i32
    %11 = arith.cmpi ne, %10, %c0_i32_13 : i32
    scf.if %11 {
      %c0_14 = arith.constant 0 : index
      %c0_15 = arith.constant 0 : index
      %c0_16 = arith.constant 0 : index
      %12 = vector.load %arg7[%c0_14, %c0_15, %c0_16] : memref<6x4x32xf32, #tpu.memory_space<vmem>>, vector<6x4x32xf32>
      %c0_17 = arith.constant 0 : index
      %c0_18 = arith.constant 0 : index
      %c0_19 = arith.constant 0 : index
      %13 = vector.load %arg5[%c0_17, %c0_18, %c0_19] : memref<6x1x32xf32, #tpu.memory_space<vmem>>, vector<6x1x32xf32>
      %14 = vector.broadcast %13 : vector<6x1x32xf32> to vector<6x4x32xf32>
      %15 = arith.addf %12, %14 : vector<6x4x32xf32>
      %c0_20 = arith.constant 0 : index
      %c0_21 = arith.constant 0 : index
      %c0_22 = arith.constant 0 : index
      %16 = vector.load %arg6[%c0_20, %c0_21, %c0_22] : memref<6x4x32xf32, #tpu.memory_space<vmem>>, vector<6x4x32xf32>
      tpu.vector_store %arg6[%c0_20, %c0_21, %c0_22], %15 {strides = array<i32>} : memref<6x4x32xf32, #tpu.memory_space<vmem>>, vector<6x4x32xf32>,
    } else {
    }
    return
  }
  func.func @transform_0(%arg0: i32, %arg1: i32, %arg2: i32) -> (i32, i32, i32) {
    %c0_i32 = arith.constant 0 : i32
    %c0_i32_0 = arith.constant 0 : i32
    return %arg0, %c0_i32, %arg2 : i32, i32, i32
  }
  func.func @transform_1(%arg0: i32, %arg1: i32, %arg2: i32) -> (i32, i32, i32) {
    %c0_i32 = arith.constant 0 : i32
    return %arg0, %arg1, %arg2 : i32, i32, i32
  }
  func.func @transform_2(%arg0: i32, %arg1: i32, %arg2: i32) -> (i32, i32, i32) {
    %c0_i32 = arith.constant 0 : i32
    %c0_i32_0 = arith.constant 0 : i32
    return %arg0, %c0_i32, %arg1 : i32, i32, i32
  }
  func.func @transform_3(%arg0: i32, %arg1: i32, %arg2: i32) -> (i32, i32, i32) {
    %c0_i32 = arith.constant 0 : i32
    %c0_i32_0 = arith.constant 0 : i32
    return %arg0, %c0_i32, %arg1 : i32, i32, i32
  }
}

</mosaic_0001>

<llo_original>
// kernel: tpu_custom_call.1
$region0: #{tpu_custom_call.1}
  #allocation0 [shape = 'u32[]', space=smem, size = 0x4, offset = 0x4, fixed_abs, tag = 'smem constant byte address 0x4 - core index']
  #allocation1 [shape = 'u32[144,128]{1,0:T(1,128)}', space=vmem, size = 0x12000, scoped, tag = 'internal scratch']
  #allocation2 [shape = 'f32[6,4,32]{2,1,0:T(4,128)}', space=vmem, size = 0x3000, scoped, tag = 'scratch operand']
  %s0 = inlined_call_operand.vmem [shape: f32[6,4,16], index: 0, kind: input, shape index: {}]
  %s1 = inlined_call_operand.vmem [shape: f32[6,32,16], index: 1, kind: input, shape index: {}]
  %s2 = inlined_call_operand.vmem [shape: f32[6,1,32], index: 2, kind: input, shape index: {}]
  %s3 = inlined_call_operand.hbm [shape: f32[6,4,32], index: 3, kind: output, shape index: {}]
  %s4 = sld [smem:[#allocation0]]
  $region30: #{tpu_custom_call.1} parent=0
    _
  %s6 = ssub.s32 1, %s4
  %s7 = scalar_select 0, %s6, %s4
  $region1: #{tpu_custom_call.1} parent=0
    #allocation3 [shape = 'u8[12288]{0}', space=vmem, size = 0x3000, scoped, tag = 'output window, operand 0, single buffered']
    #allocation4 [shape = 's32[1]{0}', space=sflag, size = 0x4, scoped, tag = 'scoped memory for tpu_custom_call.1']
    %8 = vsyncpa [#allocation4], 0
    // Predicated region
    $region2: #{tpu_custom_call.1} parent=1 // pred_check
      _
    $region3: #{tpu_custom_call.1} parent=1 // pred_check_branch
      %10 = sbr.rel (0) target = $region5
    $region4: #{tpu_custom_call.1} parent=1 // pred_region
      _
    $region5: #{tpu_custom_call.1} parent=1 // pred_fallthru
      _
    // Predicated region
    $region6: #{tpu_custom_call.1} parent=1 // pred_check
      _
    $region7: #{tpu_custom_call.1} parent=1 // pred_check_branch
      %12 = sbr.rel (0) target = $region9
    $region8: #{tpu_custom_call.1} parent=1 // pred_region
      _
    $region9: #{tpu_custom_call.1} parent=1 // pred_fallthru
      _
    // Predicated region
    $region10: #{tpu_custom_call.1} parent=1 // pred_check
      _
    $region11: #{tpu_custom_call.1} parent=1 // pred_check_branch
      %14 = sbr.rel (0) target = $region13
    $region12: #{tpu_custom_call.1} parent=1 // pred_region
      _
    $region13: #{tpu_custom_call.1} parent=1 // pred_fallthru
      _
    %p15 = scmp.eq.s32.totalorder 0, 0
    // Predicated region
    $region14: #{tpu_custom_call.1} parent=1 // pred_check
      %p16 = pneg %p15
    $region15: #{tpu_custom_call.1} parent=1 // pred_check_branch
      %18 = sbr.rel (%p16) target = $region17
    $region16: #{tpu_custom_call.1} parent=1 // pred_region
      %vm19 = vcmask 257024
      %20 = vst.msk [vmem:[#allocation2] sm:$0xf] %vm19, 0.0
      %21 = vst.msk [vmem:[#allocation2 + $0x4] sm:$0xf] %vm19, 0.0
      %22 = vst.msk [vmem:[#allocation2 + $0x8] sm:$0xf] %vm19, 0.0
      %23 = vst.msk [vmem:[#allocation2 + $0xc] sm:$0xf] %vm19, 0.0
      %24 = vst.msk [vmem:[#allocation2 + $0x10] sm:$0xf] %vm19, 0.0
      %25 = vst.msk [vmem:[#allocation2 + $0x14] sm:$0xf] %vm19, 0.0
    $region17: #{tpu_custom_call.1} parent=1 // pred_fallthru
      _
    %v26 = vld [vmem:[%s1] sm:$0xff]
    %v27 = vld [vmem:[%s1 + $0x8] sm:$0xff]
    %v28 = vld [vmem:[%s1 + $0x10] sm:$0xff]
    %v29 = vld [vmem:[%s1 + $0x18] sm:$0xff]
    %v30 = vld [vmem:[%s1 + $0x20] sm:$0xff]
    %v31 = vld [vmem:[%s1 + $0x28] sm:$0xff]
    %v32 = vld [vmem:[%s1 + $0x30] sm:$0xff]
    %v33 = vld [vmem:[%s1 + $0x38] sm:$0xff]
    %v34 = vld [vmem:[%s1 + $0x40] sm:$0xff]
    %v35 = vld [vmem:[%s1 + $0x48] sm:$0xff]
    %v36 = vld [vmem:[%s1 + $0x50] sm:$0xff]
    %v37 = vld [vmem:[%s1 + $0x58] sm:$0xff]
    %v38 = vld [vmem:[%s1 + $0x60] sm:$0xff]
    %v39 = vld [vmem:[%s1 + $0x68] sm:$0xff]
    %v40 = vld [vmem:[%s1 + $0x70] sm:$0xff]
    %v41 = vld [vmem:[%s1 + $0x78] sm:$0xff]
    %v42 = vld [vmem:[%s1 + $0x80] sm:$0xff]
    %v43 = vld [vmem:[%s1 + $0x88] sm:$0xff]
    %v44 = vld [vmem:[%s1 + $0x90] sm:$0xff]
    %v45 = vld [vmem:[%s1 + $0x98] sm:$0xff]
    %v46 = vld [vmem:[%s1 + $0xa0] sm:$0xff]
    %v47 = vld [vmem:[%s1 + $0xa8] sm:$0xff]
    %v48 = vld [vmem:[%s1 + $0xb0] sm:$0xff]
    %v49 = vld [vmem:[%s1 + $0xb8] sm:$0xff]
    %v50 = vld [vmem:[%s0] sm:$0xf]
    %v51 = vld [vmem:[%s0 + $0x4] sm:$0xf]
    %v52 = vld [vmem:[%s0 + $0x8] sm:$0xf]
    %v53 = vld [vmem:[%s0 + $0xc] sm:$0xf]
    %v54 = vld [vmem:[%s0 + $0x10] sm:$0xf]
    %v55 = vld [vmem:[%s0 + $0x14] sm:$0xf]
    %v56 = vld [vmem:[#allocation2] sm:$0xf]
    %v57 = vld [vmem:[#allocation2 + $0x4] sm:$0xf]
    %v58 = vld [vmem:[#allocation2 + $0x8] sm:$0xf]
    %v59 = vld [vmem:[#allocation2 + $0xc] sm:$0xf]
    %v60 = vld [vmem:[#allocation2 + $0x10] sm:$0xf]
    %v61 = vld [vmem:[#allocation2 + $0x14] sm:$0xf]
    %vm62 = vcmask 130048
    %v64 = vsel %vm62, %v50, 0
    %v67 = vsel %vm62, %v26, 0
    %v70 = vsel %vm62, %v27, 0
    %v73 = vsel %vm62, %v28, 0
    %v76 = vsel %vm62, %v29, 0
    %78 = vmatprep.subr.mxu0 0.0
    %79 = vmatpush1.xpose.msra.mxu0 0.0
    %80 = vmatprep.subr.mxu0 0.0
    %81 = vmatpush1.xpose.msra.mxu0 0.0
    %82 = vmatprep.subr.mxu0 0.0
    %83 = vmatpush1.xpose.msra.mxu0 0.0
    %84 = vmatprep.subr.mxu0 0.0
    %85 = vmatpush1.xpose.msra.mxu0 0.0
    %86 = vmatprep.subr.mxu0 0.0
    %87 = vmatpush1.xpose.msra.mxu0 0.0
    %88 = vmatprep.subr.mxu0 0.0
    %89 = vmatpush1.xpose.msra.mxu0 0.0
    %90 = vmatprep.subr.mxu0 0.0
    %91 = vmatpush1.xpose.msra.mxu0 0.0
    %92 = vmatprep.subr.mxu0 0.0
    %93 = vmatpush1.xpose.msra.mxu0 0.0
    %94 = vmatprep.subr.mxu0 0.0
    %95 = vmatpush1.xpose.msra.mxu0 0.0
    %96 = vmatprep.subr.mxu0 0.0
    %97 = vmatpush1.xpose.msra.mxu0 0.0
    %98 = vmatprep.subr.mxu0 0.0
    %99 = vmatpush1.xpose.msra.mxu0 0.0
    %100 = vmatprep.subr.mxu0 0.0
    %101 = vmatpush1.xpose.msra.mxu0 0.0
    %102 = vmatprep.subr.mxu0 0.0
    %103 = vmatpush1.xpose.msra.mxu0 %v76
    %104 = vmatprep.subr.mxu0 0.0
    %105 = vmatpush1.xpose.msra.mxu0 %v73
    %106 = vmatprep.subr.mxu0 0.0
    %107 = vmatpush1.xpose.msra.mxu0 %v70
    %108 = vmatprep.subr.mxu0 0.0
    %109 = vmatpush1.xpose.msra.mxu0 %v67
    %110 = vmatprep.subr.mxu0 0.0
    %111 = vmatpush2.xpose.msra.mxu0 0.0
    %112 = vmatprep.subr.mxu0 0.0
    %113 = vmatpush2.xpose.msra.mxu0 0.0
    %114 = vmatprep.subr.mxu0 0.0
    %115 = vmatpush2.xpose.msra.mxu0 0.0
    %116 = vmatprep.subr.mxu0 0.0
    %117 = vmatpush2.xpose.msra.mxu0 0.0
    %118 = vmatprep.subr.mxu0 0.0
    %119 = vmatpush2.xpose.msra.mxu0 0.0
    %120 = vmatprep.subr.mxu0 0.0
    %121 = vmatpush2.xpose.msra.mxu0 0.0
    %122 = vmatprep.subr.mxu0 0.0
    %123 = vmatpush2.xpose.msra.mxu0 0.0
    %124 = vmatprep.subr.mxu0 0.0
    %125 = vmatpush2.xpose.msra.mxu0 0.0
    %126 = vmatprep.subr.mxu0 0.0
    %127 = vmatpush2.xpose.msra.mxu0 0.0
    %128 = vmatprep.subr.mxu0 0.0
    %129 = vmatpush2.xpose.msra.mxu0 0.0
    %130 = vmatprep.subr.mxu0 0.0
    %131 = vmatpush2.xpose.msra.mxu0 0.0
    %132 = vmatprep.subr.mxu0 0.0
    %133 = vmatpush2.xpose.msra.mxu0 0.0
    %134 = vmatprep.subr.mxu0 0.0
    %135 = vmatpush2.xpose.msra.mxu0 0.0
    %136 = vmatprep.subr.mxu0 0.0
    %137 = vmatpush2.xpose.msra.mxu0 0.0
    %138 = vmatprep.subr.mxu0 0.0
    %139 = vmatpush2.xpose.msra.mxu0 0.0
    %140 = vmatprep.subr.mxu0 0.0
    %141 = vmatpush2.xpose.msra.mxu0 0.0
    %142 = vmatprep.mubr.f32.mxu0 0.0
    %143 = vmatmul.mubr.f32.gmra.mxu0 %v64
    %v144 = vpop.f32.mrf.mxu0
    %v145 = vadd.f32 0.0, %v144
    %v146 = vpop.f32.mrf.mxu0
    %147 = vdwg.mxu0
    %v149 = vsel %vm62, %v51, 0
    %v152 = vsel %vm62, %v30, 0
    %v155 = vsel %vm62, %v31, 0
    %v158 = vsel %vm62, %v32, 0
    %v161 = vsel %vm62, %v33, 0
    %163 = vmatprep.subr.mxu0 0.0
    %164 = vmatpush1.xpose.msra.mxu0 0.0
    %165 = vmatprep.subr.mxu0 0.0
    %166 = vmatpush1.xpose.msra.mxu0 0.0
    %167 = vmatprep.subr.mxu0 0.0
    %168 = vmatpush1.xpose.msra.mxu0 0.0
    %169 = vmatprep.subr.mxu0 0.0
    %170 = vmatpush1.xpose.msra.mxu0 0.0
    %171 = vmatprep.subr.mxu0 0.0
    %172 = vmatpush1.xpose.msra.mxu0 0.0
    %173 = vmatprep.subr.mxu0 0.0
    %174 = vmatpush1.xpose.msra.mxu0 0.0
    %175 = vmatprep.subr.mxu0 0.0
    %176 = vmatpush1.xpose.msra.mxu0 0.0
    %177 = vmatprep.subr.mxu0 0.0
    %178 = vmatpush1.xpose.msra.mxu0 0.0
    %179 = vmatprep.subr.mxu0 0.0
    %180 = vmatpush1.xpose.msra.mxu0 0.0
    %181 = vmatprep.subr.mxu0 0.0
    %182 = vmatpush1.xpose.msra.mxu0 0.0
    %183 = vmatprep.subr.mxu0 0.0
    %184 = vmatpush1.xpose.msra.mxu0 0.0
    %185 = vmatprep.subr.mxu0 0.0
    %186 = vmatpush1.xpose.msra.mxu0 0.0
    %187 = vmatprep.subr.mxu0 0.0
    %188 = vmatpush1.xpose.msra.mxu0 %v161
    %189 = vmatprep.subr.mxu0 0.0
    %190 = vmatpush1.xpose.msra.mxu0 %v158
    %191 = vmatprep.subr.mxu0 0.0
    %192 = vmatpush1.xpose.msra.mxu0 %v155
    %193 = vmatprep.subr.mxu0 0.0
    %194 = vmatpush1.xpose.msra.mxu0 %v152
    %195 = vmatprep.subr.mxu0 0.0
    %196 = vmatpush2.xpose.msra.mxu0 0.0
    %197 = vmatprep.subr.mxu0 0.0
    %198 = vmatpush2.xpose.msra.mxu0 0.0
    %199 = vmatprep.subr.mxu0 0.0
    %200 = vmatpush2.xpose.msra.mxu0 0.0
    %201 = vmatprep.subr.mxu0 0.0
    %202 = vmatpush2.xpose.msra.mxu0 0.0
    %203 = vmatprep.subr.mxu0 0.0
    %204 = vmatpush2.xpose.msra.mxu0 0.0
    %205 = vmatprep.subr.mxu0 0.0
    %206 = vmatpush2.xpose.msra.mxu0 0.0
    %207 = vmatprep.subr.mxu0 0.0
    %208 = vmatpush2.xpose.msra.mxu0 0.0
    %209 = vmatprep.subr.mxu0 0.0
    %210 = vmatpush2.xpose.msra.mxu0 0.0
    %211 = vmatprep.subr.mxu0 0.0
    %212 = vmatpush2.xpose.msra.mxu0 0.0
    %213 = vmatprep.subr.mxu0 0.0
    %214 = vmatpush2.xpose.msra.mxu0 0.0
    %215 = vmatprep.subr.mxu0 0.0
    %216 = vmatpush2.xpose.msra.mxu0 0.0
    %217 = vmatprep.subr.mxu0 0.0
    %218 = vmatpush2.xpose.msra.mxu0 0.0
    %219 = vmatprep.subr.mxu0 0.0
    %220 = vmatpush2.xpose.msra.mxu0 0.0
    %221 = vmatprep.subr.mxu0 0.0
    %222 = vmatpush2.xpose.msra.mxu0 0.0
    %223 = vmatprep.subr.mxu0 0.0
    %224 = vmatpush2.xpose.msra.mxu0 0.0
    %225 = vmatprep.subr.mxu0 0.0
    %226 = vmatpush2.xpose.msra.mxu0 0.0
    %227 = vmatprep.mubr.f32.mxu0 0.0
    %228 = vmatmul.mubr.f32.gmra.mxu0 %v149
    %v229 = vpop.f32.mrf.mxu0
    %v230 = vadd.f32 0.0, %v229
    %v231 = vpop.f32.mrf.mxu0
    %232 = vdwg.mxu0
    %v234 = vsel %vm62, %v52, 0
    %v237 = vsel %vm62, %v34, 0
    %v240 = vsel %vm62, %v35, 0
    %v243 = vsel %vm62, %v36, 0
    %v246 = vsel %vm62, %v37, 0
    %248 = vmatprep.subr.mxu0 0.0
    %249 = vmatpush1.xpose.msra.mxu0 0.0
    %250 = vmatprep.subr.mxu0 0.0
    %251 = vmatpush1.xpose.msra.mxu0 0.0
    %252 = vmatprep.subr.mxu0 0.0
    %253 = vmatpush1.xpose.msra.mxu0 0.0
    %254 = vmatprep.subr.mxu0 0.0
    %255 = vmatpush1.xpose.msra.mxu0 0.0
    %256 = vmatprep.subr.mxu0 0.0
    %257 = vmatpush1.xpose.msra.mxu0 0.0
    %258 = vmatprep.subr.mxu0 0.0
    %259 = vmatpush1.xpose.msra.mxu0 0.0
    %260 = vmatprep.subr.mxu0 0.0
    %261 = vmatpush1.xpose.msra.mxu0 0.0
    %262 = vmatprep.subr.mxu0 0.0
    %263 = vmatpush1.xpose.msra.mxu0 0.0
    %264 = vmatprep.subr.mxu0 0.0
    %265 = vmatpush1.xpose.msra.mxu0 0.0
    %266 = vmatprep.subr.mxu0 0.0
    %267 = vmatpush1.xpose.msra.mxu0 0.0
    %268 = vmatprep.subr.mxu0 0.0
    %269 = vmatpush1.xpose.msra.mxu0 0.0
    %270 = vmatprep.subr.mxu0 0.0
    %271 = vmatpush1.xpose.msra.mxu0 0.0
    %272 = vmatprep.subr.mxu0 0.0
    %273 = vmatpush1.xpose.msra.mxu0 %v246
    %274 = vmatprep.subr.mxu0 0.0
    %275 = vmatpush1.xpose.msra.mxu0 %v243
    %276 = vmatprep.subr.mxu0 0.0
    %277 = vmatpush1.xpose.msra.mxu0 %v240
    %278 = vmatprep.subr.mxu0 0.0
    %279 = vmatpush1.xpose.msra.mxu0 %v237
    %280 = vmatprep.subr.mxu0 0.0
    %281 = vmatpush2.xpose.msra.mxu0 0.0
    %282 = vmatprep.subr.mxu0 0.0
    %283 = vmatpush2.xpose.msra.mxu0 0.0
    %284 = vmatprep.subr.mxu0 0.0
    %285 = vmatpush2.xpose.msra.mxu0 0.0
    %286 = vmatprep.subr.mxu0 0.0
    %287 = vmatpush2.xpose.msra.mxu0 0.0
    %288 = vmatprep.subr.mxu0 0.0
    %289 = vmatpush2.xpose.msra.mxu0 0.0
    %290 = vmatprep.subr.mxu0 0.0
    %291 = vmatpush2.xpose.msra.mxu0 0.0
    %292 = vmatprep.subr.mxu0 0.0
    %293 = vmatpush2.xpose.msra.mxu0 0.0
    %294 = vmatprep.subr.mxu0 0.0
    %295 = vmatpush2.xpose.msra.mxu0 0.0
    %296 = vmatprep.subr.mxu0 0.0
    %297 = vmatpush2.xpose.msra.mxu0 0.0
    %298 = vmatprep.subr.mxu0 0.0
    %299 = vmatpush2.xpose.msra.mxu0 0.0
    %300 = vmatprep.subr.mxu0 0.0
    %301 = vmatpush2.xpose.msra.mxu0 0.0
    %302 = vmatprep.subr.mxu0 0.0
    %303 = vmatpush2.xpose.msra.mxu0 0.0
    %304 = vmatprep.subr.mxu0 0.0
    %305 = vmatpush2.xpose.msra.mxu0 0.0
    %306 = vmatprep.subr.mxu0 0.0
    %307 = vmatpush2.xpose.msra.mxu0 0.0
    %308 = vmatprep.subr.mxu0 0.0
    %309 = vmatpush2.xpose.msra.mxu0 0.0
    %310 = vmatprep.subr.mxu0 0.0
    %311 = vmatpush2.xpose.msra.mxu0 0.0
    %312 = vmatprep.mubr.f32.mxu0 0.0
    %313 = vmatmul.mubr.f32.gmra.mxu0 %v234
    %v314 = vpop.f32.mrf.mxu0
    %v315 = vadd.f32 0.0, %v314
    %v316 = vpop.f32.mrf.mxu0
    %317 = vdwg.mxu0
    %v319 = vsel %vm62, %v53, 0
    %v322 = vsel %vm62, %v38, 0
    %v325 = vsel %vm62, %v39, 0
    %v328 = vsel %vm62, %v40, 0
    %v331 = vsel %vm62, %v41, 0
    %333 = vmatprep.subr.mxu0 0.0
    %334 = vmatpush1.xpose.msra.mxu0 0.0
    %335 = vmatprep.subr.mxu0 0.0
    %336 = vmatpush1.xpose.msra.mxu0 0.0
    %337 = vmatprep.subr.mxu0 0.0
    %338 = vmatpush1.xpose.msra.mxu0 0.0
    %339 = vmatprep.subr.mxu0 0.0
    %340 = vmatpush1.xpose.msra.mxu0 0.0
    %341 = vmatprep.subr.mxu0 0.0
    %342 = vmatpush1.xpose.msra.mxu0 0.0
    %343 = vmatprep.subr.mxu0 0.0
    %344 = vmatpush1.xpose.msra.mxu0 0.0
    %345 = vmatprep.subr.mxu0 0.0
    %346 = vmatpush1.xpose.msra.mxu0 0.0
    %347 = vmatprep.subr.mxu0 0.0
    %348 = vmatpush1.xpose.msra.mxu0 0.0
    %349 = vmatprep.subr.mxu0 0.0
    %350 = vmatpush1.xpose.msra.mxu0 0.0
    %351 = vmatprep.subr.mxu0 0.0
    %352 = vmatpush1.xpose.msra.mxu0 0.0
    %353 = vmatprep.subr.mxu0 0.0
    %354 = vmatpush1.xpose.msra.mxu0 0.0
    %355 = vmatprep.subr.mxu0 0.0
    %356 = vmatpush1.xpose.msra.mxu0 0.0
    %357 = vmatprep.subr.mxu0 0.0
    %358 = vmatpush1.xpose.msra.mxu0 %v331
    %359 = vmatprep.subr.mxu0 0.0
    %360 = vmatpush1.xpose.msra.mxu0 %v328
    %361 = vmatprep.subr.mxu0 0.0
    %362 = vmatpush1.xpose.msra.mxu0 %v325
    %363 = vmatprep.subr.mxu0 0.0
    %364 = vmatpush1.xpose.msra.mxu0 %v322
    %365 = vmatprep.subr.mxu0 0.0
    %366 = vmatpush2.xpose.msra.mxu0 0.0
    %367 = vmatprep.subr.mxu0 0.0
    %368 = vmatpush2.xpose.msra.mxu0 0.0
    %369 = vmatprep.subr.mxu0 0.0
    %370 = vmatpush2.xpose.msra.mxu0 0.0
    %371 = vmatprep.subr.mxu0 0.0
    %372 = vmatpush2.xpose.msra.mxu0 0.0
    %373 = vmatprep.subr.mxu0 0.0
    %374 = vmatpush2.xpose.msra.mxu0 0.0
    %375 = vmatprep.subr.mxu0 0.0
    %376 = vmatpush2.xpose.msra.mxu0 0.0
    %377 = vmatprep.subr.mxu0 0.0
    %378 = vmatpush2.xpose.msra.mxu0 0.0
    %379 = vmatprep.subr.mxu0 0.0
    %380 = vmatpush2.xpose.msra.mxu0 0.0
    %381 = vmatprep.subr.mxu0 0.0
    %382 = vmatpush2.xpose.msra.mxu0 0.0
    %383 = vmatprep.subr.mxu0 0.0
    %384 = vmatpush2.xpose.msra.mxu0 0.0
    %385 = vmatprep.subr.mxu0 0.0
    %386 = vmatpush2.xpose.msra.mxu0 0.0
    %387 = vmatprep.subr.mxu0 0.0
    %388 = vmatpush2.xpose.msra.mxu0 0.0
    %389 = vmatprep.subr.mxu0 0.0
    %390 = vmatpush2.xpose.msra.mxu0 0.0
    %391 = vmatprep.subr.mxu0 0.0
    %392 = vmatpush2.xpose.msra.mxu0 0.0
    %393 = vmatprep.subr.mxu0 0.0
    %394 = vmatpush2.xpose.msra.mxu0 0.0
    %395 = vmatprep.subr.mxu0 0.0
    %396 = vmatpush2.xpose.msra.mxu0 0.0
    %397 = vmatprep.mubr.f32.mxu0 0.0
    %398 = vmatmul.mubr.f32.gmra.mxu0 %v319
    %v399 = vpop.f32.mrf.mxu0
    %v400 = vadd.f32 0.0, %v399
    %v401 = vpop.f32.mrf.mxu0
    %402 = vdwg.mxu0
    %v404 = vsel %vm62, %v54, 0
    %v407 = vsel %vm62, %v42, 0
    %v410 = vsel %vm62, %v43, 0
    %v413 = vsel %vm62, %v44, 0
    %v416 = vsel %vm62, %v45, 0
    %418 = vmatprep.subr.mxu0 0.0
    %419 = vmatpush1.xpose.msra.mxu0 0.0
    %420 = vmatprep.subr.mxu0 0.0
    %421 = vmatpush1.xpose.msra.mxu0 0.0
    %422 = vmatprep.subr.mxu0 0.0
    %423 = vmatpush1.xpose.msra.mxu0 0.0
    %424 = vmatprep.subr.mxu0 0.0
    %425 = vmatpush1.xpose.msra.mxu0 0.0
    %426 = vmatprep.subr.mxu0 0.0
    %427 = vmatpush1.xpose.msra.mxu0 0.0
    %428 = vmatprep.subr.mxu0 0.0
    %429 = vmatpush1.xpose.msra.mxu0 0.0
    %430 = vmatprep.subr.mxu0 0.0
    %431 = vmatpush1.xpose.msra.mxu0 0.0
    %432 = vmatprep.subr.mxu0 0.0
    %433 = vmatpush1.xpose.msra.mxu0 0.0
    %434 = vmatprep.subr.mxu0 0.0
    %435 = vmatpush1.xpose.msra.mxu0 0.0
    %436 = vmatprep.subr.mxu0 0.0
    %437 = vmatpush1.xpose.msra.mxu0 0.0
    %438 = vmatprep.subr.mxu0 0.0
    %439 = vmatpush1.xpose.msra.mxu0 0.0
    %440 = vmatprep.subr.mxu0 0.0
    %441 = vmatpush1.xpose.msra.mxu0 0.0
    %442 = vmatprep.subr.mxu0 0.0
    %443 = vmatpush1.xpose.msra.mxu0 %v416
    %444 = vmatprep.subr.mxu0 0.0
    %445 = vmatpush1.xpose.msra.mxu0 %v413
    %446 = vmatprep.subr.mxu0 0.0
    %447 = vmatpush1.xpose.msra.mxu0 %v410
    %448 = vmatprep.subr.mxu0 0.0
    %449 = vmatpush1.xpose.msra.mxu0 %v407
    %450 = vmatprep.subr.mxu0 0.0
    %451 = vmatpush2.xpose.msra.mxu0 0.0
    %452 = vmatprep.subr.mxu0 0.0
    %453 = vmatpush2.xpose.msra.mxu0 0.0
    %454 = vmatprep.subr.mxu0 0.0
    %455 = vmatpush2.xpose.msra.mxu0 0.0
    %456 = vmatprep.subr.mxu0 0.0
    %457 = vmatpush2.xpose.msra.mxu0 0.0
    %458 = vmatprep.subr.mxu0 0.0
    %459 = vmatpush2.xpose.msra.mxu0 0.0
    %460 = vmatprep.subr.mxu0 0.0
    %461 = vmatpush2.xpose.msra.mxu0 0.0
    %462 = vmatprep.subr.mxu0 0.0
    %463 = vmatpush2.xpose.msra.mxu0 0.0
    %464 = vmatprep.subr.mxu0 0.0
    %465 = vmatpush2.xpose.msra.mxu0 0.0
    %466 = vmatprep.subr.mxu0 0.0
    %467 = vmatpush2.xpose.msra.mxu0 0.0
    %468 = vmatprep.subr.mxu0 0.0
    %469 = vmatpush2.xpose.msra.mxu0 0.0
    %470 = vmatprep.subr.mxu0 0.0
    %471 = vmatpush2.xpose.msra.mxu0 0.0
    %472 = vmatprep.subr.mxu0 0.0
    %473 = vmatpush2.xpose.msra.mxu0 0.0
    %474 = vmatprep.subr.mxu0 0.0
    %475 = vmatpush2.xpose.msra.mxu0 0.0
    %476 = vmatprep.subr.mxu0 0.0
    %477 = vmatpush2.xpose.msra.mxu0 0.0
    %478 = vmatprep.subr.mxu0 0.0
    %479 = vmatpush2.xpose.msra.mxu0 0.0
    %480 = vmatprep.subr.mxu0 0.0
    %481 = vmatpush2.xpose.msra.mxu0 0.0
    %482 = vmatprep.mubr.f32.mxu0 0.0
    %483 = vmatmul.mubr.f32.gmra.mxu0 %v404
    %v484 = vpop.f32.mrf.mxu0
    %v485 = vadd.f32 0.0, %v484
    %v486 = vpop.f32.mrf.mxu0
    %487 = vdwg.mxu0
    %v489 = vsel %vm62, %v55, 0
    %v492 = vsel %vm62, %v46, 0
    %v495 = vsel %vm62, %v47, 0
    %v498 = vsel %vm62, %v48, 0
    %v501 = vsel %vm62, %v49, 0
    %503 = vmatprep.subr.mxu0 0.0
    %504 = vmatpush1.xpose.msra.mxu0 0.0
    %505 = vmatprep.subr.mxu0 0.0
    %506 = vmatpush1.xpose.msra.mxu0 0.0
    %507 = vmatprep.subr.mxu0 0.0
    %508 = vmatpush1.xpose.msra.mxu0 0.0
    %509 = vmatprep.subr.mxu0 0.0
    %510 = vmatpush1.xpose.msra.mxu0 0.0
    %511 = vmatprep.subr.mxu0 0.0
    %512 = vmatpush1.xpose.msra.mxu0 0.0
    %513 = vmatprep.subr.mxu0 0.0
    %514 = vmatpush1.xpose.msra.mxu0 0.0
    %515 = vmatprep.subr.mxu0 0.0
    %516 = vmatpush1.xpose.msra.mxu0 0.0
    %517 = vmatprep.subr.mxu0 0.0
    %518 = vmatpush1.xpose.msra.mxu0 0.0
    %519 = vmatprep.subr.mxu0 0.0
    %520 = vmatpush1.xpose.msra.mxu0 0.0
    %521 = vmatprep.subr.mxu0 0.0
    %522 = vmatpush1.xpose.msra.mxu0 0.0
    %523 = vmatprep.subr.mxu0 0.0
    %524 = vmatpush1.xpose.msra.mxu0 0.0
    %525 = vmatprep.subr.mxu0 0.0
    %526 = vmatpush1.xpose.msra.mxu0 0.0
    %527 = vmatprep.subr.mxu0 0.0
    %528 = vmatpush1.xpose.msra.mxu0 %v501
    %529 = vmatprep.subr.mxu0 0.0
    %530 = vmatpush1.xpose.msra.mxu0 %v498
    %531 = vmatprep.subr.mxu0 0.0
    %532 = vmatpush1.xpose.msra.mxu0 %v495
    %533 = vmatprep.subr.mxu0 0.0
    %534 = vmatpush1.xpose.msra.mxu0 %v492
    %535 = vmatprep.subr.mxu0 0.0
    %536 = vmatpush2.xpose.msra.mxu0 0.0
    %537 = vmatprep.subr.mxu0 0.0
    %538 = vmatpush2.xpose.msra.mxu0 0.0
    %539 = vmatprep.subr.mxu0 0.0
    %540 = vmatpush2.xpose.msra.mxu0 0.0
    %541 = vmatprep.subr.mxu0 0.0
    %542 = vmatpush2.xpose.msra.mxu0 0.0
    %543 = vmatprep.subr.mxu0 0.0
    %544 = vmatpush2.xpose.msra.mxu0 0.0
    %545 = vmatprep.subr.mxu0 0.0
    %546 = vmatpush2.xpose.msra.mxu0 0.0
    %547 = vmatprep.subr.mxu0 0.0
    %548 = vmatpush2.xpose.msra.mxu0 0.0
    %549 = vmatprep.subr.mxu0 0.0
    %550 = vmatpush2.xpose.msra.mxu0 0.0
    %551 = vmatprep.subr.mxu0 0.0
    %552 = vmatpush2.xpose.msra.mxu0 0.0
    %553 = vmatprep.subr.mxu0 0.0
    %554 = vmatpush2.xpose.msra.mxu0 0.0
    %555 = vmatprep.subr.mxu0 0.0
    %556 = vmatpush2.xpose.msra.mxu0 0.0
    %557 = vmatprep.subr.mxu0 0.0
    %558 = vmatpush2.xpose.msra.mxu0 0.0
    %559 = vmatprep.subr.mxu0 0.0
    %560 = vmatpush2.xpose.msra.mxu0 0.0
    %561 = vmatprep.subr.mxu0 0.0
    %562 = vmatpush2.xpose.msra.mxu0 0.0
    %563 = vmatprep.subr.mxu0 0.0
    %564 = vmatpush2.xpose.msra.mxu0 0.0
    %565 = vmatprep.subr.mxu0 0.0
    %566 = vmatpush2.xpose.msra.mxu0 0.0
    %567 = vmatprep.mubr.f32.mxu0 0.0
    %568 = vmatmul.mubr.f32.gmra.mxu0 %v489
    %v569 = vpop.f32.mrf.mxu0
    %v570 = vadd.f32 0.0, %v569
    %v571 = vpop.f32.mrf.mxu0
    %572 = vdwg.mxu0
    %v573 = vadd.f32 %v56, %v145
    %v574 = vadd.f32 %v57, %v230
    %v575 = vadd.f32 %v58, %v315
    %v576 = vadd.f32 %v59, %v400
    %v577 = vadd.f32 %v60, %v485
    %v578 = vadd.f32 %v61, %v570
    %vm579 = vcmask 257024
    %580 = vst.msk [vmem:[#allocation2] sm:$0xf] %vm579, %v573
    %581 = vst.msk [vmem:[#allocation2 + $0x4] sm:$0xf] %vm579, %v574
    %582 = vst.msk [vmem:[#allocation2 + $0x8] sm:$0xf] %vm579, %v575
    %583 = vst.msk [vmem:[#allocation2 + $0xc] sm:$0xf] %vm579, %v576
    %584 = vst.msk [vmem:[#allocation2 + $0x10] sm:$0xf] %vm579, %v577
    %585 = vst.msk [vmem:[#allocation2 + $0x14] sm:$0xf] %vm579, %v578
    // Predicated region
    $region18: #{tpu_custom_call.1} parent=1 // pred_check
      %p586 = pneg %p15
    $region19: #{tpu_custom_call.1} parent=1 // pred_check_branch
      %588 = sbr.rel (%p586) target = $region21
    $region20: #{tpu_custom_call.1} parent=1 // pred_region
      %v589 = vld [vmem:[#allocation2] sm:$0xf]
      %v590 = vld [vmem:[#allocation2 + $0x4] sm:$0xf]
      %v591 = vld [vmem:[#allocation2 + $0x8] sm:$0xf]
      %v592 = vld [vmem:[#allocation2 + $0xc] sm:$0xf]
      %v593 = vld [vmem:[#allocation2 + $0x10] sm:$0xf]
      %v594 = vld [vmem:[#allocation2 + $0x14] sm:$0xf]
      %v595 = vld [vmem:[%s2] sm:$0x1]
      %v596 = vld [vmem:[%s2 + $0x1] sm:$0x1]
      %v597 = vld [vmem:[%s2 + $0x2] sm:$0x1]
      %v598 = vld [vmem:[%s2 + $0x3] sm:$0x1]
      %v599 = vld [vmem:[%s2 + $0x4] sm:$0x1]
      %v600 = vld [vmem:[%s2 + $0x5] sm:$0x1]
      %v607 = vlaneseq
      %v608 = vshrl.u32 %v607, 7
      %v609 = vsub.s32 0, %v608
      %v610 = vrot.slane %v595, %v609
      %v611 = vlaneseq
      %v612 = vshrl.u32 %v611, 7
      %v613 = vsub.s32 0, %v612
      %v614 = vrot.slane %v596, %v613
      %v615 = vlaneseq
      %v616 = vshrl.u32 %v615, 7
      %v617 = vsub.s32 0, %v616
      %v618 = vrot.slane %v597, %v617
      %v619 = vlaneseq
      %v620 = vshrl.u32 %v619, 7
      %v621 = vsub.s32 0, %v620
      %v622 = vrot.slane %v598, %v621
      %v623 = vlaneseq
      %v624 = vshrl.u32 %v623, 7
      %v625 = vsub.s32 0, %v624
      %v626 = vrot.slane %v599, %v625
      %v627 = vlaneseq
      %v628 = vshrl.u32 %v627, 7
      %v629 = vsub.s32 0, %v628
      %v630 = vrot.slane %v600, %v629
      %v637 = vadd.f32 %v589, %v610
      %v638 = vadd.f32 %v590, %v614
      %v639 = vadd.f32 %v591, %v618
      %v640 = vadd.f32 %v592, %v622
      %v641 = vadd.f32 %v593, %v626
      %v642 = vadd.f32 %v594, %v630
      %643 = vst.msk [vmem:[#allocation3] sm:$0xf] %vm579, %v637
      %644 = vst.msk [vmem:[#allocation3 + $0x4] sm:$0xf] %vm579, %v638
      %645 = vst.msk [vmem:[#allocation3 + $0x8] sm:$0xf] %vm579, %v639
      %646 = vst.msk [vmem:[#allocation3 + $0xc] sm:$0xf] %vm579, %v640
      %647 = vst.msk [vmem:[#allocation3 + $0x10] sm:$0xf] %vm579, %v641
      %648 = vst.msk [vmem:[#allocation3 + $0x14] sm:$0xf] %vm579, %v642
    $region21: #{tpu_custom_call.1} parent=1 // pred_fallthru
      _
    // Predicated region
    $region22: #{tpu_custom_call.1} parent=1 // pred_check
      _
    $region23: #{tpu_custom_call.1} parent=1 // pred_check_branch
      %650 = sbr.rel (0) target = $region25
    $region24: #{tpu_custom_call.1} parent=1 // pred_region
      %s652 = ssub.s32 384, 384
      %653 = vsyncadd [#allocation4], %s652
      %s654 = sshll.u32 [#allocation3], 4
      %s655 = int_to_ptr.vmem [resolvable:$true] %s654
      %660 = dma.vmem_to_hbm [thread:$0]  %s655, 384, %s3, [#allocation4], 64, 64, 4
    $region25: #{tpu_custom_call.1} parent=1 // pred_fallthru
      _
    // Predicated region
    $region26: #{tpu_custom_call.1} parent=1 // pred_check
      _
    $region27: #{tpu_custom_call.1} parent=1 // pred_check_branch
      %662 = sbr.rel (0) target = $region29
    $region28: #{tpu_custom_call.1} parent=1 // pred_region
      %663 = dma.done [#allocation4], 384
    $region29: #{tpu_custom_call.1} parent=1 // pred_fallthru
      _
    %664 = vsyncpa [#allocation4], 1

</llo_original>
